<compile_context>
chip_gen: v6e
topology: v6e:2x2x1
jax: 0.10.0
libtpu: 0.0.40
codegen_flags: <defaults>
</compile_context>

<pallas_src>
import functools

import jax
import jax.numpy as jnp
from jax.experimental import pallas as pl
from jax.experimental.pallas import tpu as pltpu


# ---------------------------------------------------------------------------
# Fused kernel: encoder linear + sigmoid + decoder linear + paired softmax
# ---------------------------------------------------------------------------
def _decoder_fwd_kernel(x_ref, we_ref, be_ref, wd_ref, bd_ref,
                        side_ref, ans_ref, *, user_num, class_num):
    # x:(tb, R)  we:(R, L)  be:(1, L)  wd:(L, U*C)  bd:(1, U*C)
    # side:(tb, L)  ans:(tb, U*C)

    # --- encoder linear + sigmoid (reciprocal on EUP) ---
    h = (jnp.dot(x_ref[...], we_ref[...], preferred_element_type=jnp.float32)
         + be_ref[...])
    side = pl.reciprocal(1.0 + jnp.exp(-h), approx=True)
    side_ref[...] = side

    # --- decoder linear ---
    logits = (jnp.dot(side, wd_ref[...], preferred_element_type=jnp.float32)
              + bd_ref[...])

    # --- paired softmax: softmax over each contiguous group of class_num
    #     columns, written directly into the output slice (no concatenate,
    #     no in-kernel reshape).  user_num is small and static.
    for u in range(user_num):
        lo = u * class_num
        seg = logits[:, lo:lo + class_num]
        m = jnp.max(seg, axis=1, keepdims=True)
        e = jnp.exp(seg - m)
        inv = pl.reciprocal(jnp.sum(e, axis=1, keepdims=True), approx=True)
        ans_ref[:, lo:lo + class_num] = e * inv


# ---------------------------------------------------------------------------
# Wrapper (plain JAX glue around one pallas_call)
# ---------------------------------------------------------------------------
class DecoderPallas:
    """JAX/Pallas port of the PyTorch `decoder` module's forward pass."""

    def __init__(self, record_num, user_num, class_num, latent_dimension, key):
        self.record_num = record_num
        self.user_num = user_num
        self.class_num = class_num
        self.latent_dimension = latent_dimension
        self.out_feat = user_num * class_num

        k1, k2, k3, k4 = jax.random.split(key, 4)
        # PyTorch nn.Linear default init: U(-1/sqrt(fan_in), 1/sqrt(fan_in))
        be = 1.0 / float(record_num) ** 0.5
        bd = 1.0 / float(latent_dimension) ** 0.5
        # Stored transposed, row-major (in, out) so the kernel does x @ W.
        self.w_enc = jax.random.uniform(
            k1, (record_num, latent_dimension), jnp.float32, -be, be)
        self.b_enc = jax.random.uniform(
            k2, (1, latent_dimension), jnp.float32, -be, be)
        self.w_dec = jax.random.uniform(
            k3, (latent_dimension, self.out_feat), jnp.float32, -bd, bd)
        self.b_dec = jax.random.uniform(
            k4, (1, self.out_feat), jnp.float32, -bd, bd)

    def __call__(self, record_embed):
        B = record_embed.shape[0]
        R, L, O = self.record_num, self.latent_dimension, self.out_feat

        # Row-tile the batch: full batch for small B, 256-row (8-aligned)
        # tiles otherwise so auto double-buffering + megacore kick in at scale.
        tb = B if B <= 256 else 256
        grid = (pl.cdiv(B, tb),)

        kernel = functools.partial(
            _decoder_fwd_kernel,
            user_num=self.user_num, class_num=self.class_num)

        side_info, gen_answer = pl.pallas_call(
            kernel,
            out_shape=(jax.ShapeDtypeStruct((B, L), jnp.float32),
                       jax.ShapeDtypeStruct((B, O), jnp.float32)),
            grid_spec=pltpu.PrefetchScalarGridSpec(
                num_scalar_prefetch=0,
                grid=grid,
                in_specs=[
                    pl.BlockSpec((tb, R), lambda i: (i, 0)),   # record_embed
                    pl.BlockSpec((R, L), lambda i: (0, 0)),    # w_enc (whole)
                    pl.BlockSpec((1, L), lambda i: (0, 0)),    # b_enc
                    pl.BlockSpec((L, O), lambda i: (0, 0)),    # w_dec (whole)
                    pl.BlockSpec((1, O), lambda i: (0, 0)),    # b_dec
                ],
                out_specs=[
                    pl.BlockSpec((tb, L), lambda i: (i, 0)),   # side_info
                    pl.BlockSpec((tb, O), lambda i: (i, 0)),   # gen_answer
                ],
            ),
            compiler_params=pltpu.CompilerParams(
                dimension_semantics=("parallel",)),
        )(record_embed.astype(jnp.float32),
          self.w_enc, self.b_enc, self.w_dec, self.b_dec)

        return side_info, gen_answer


if __name__ == "__main__":
    record_num = 32
    user_num = 4
    class_num = 4
    latent_dimension = 8
    replay_num = 8  # batch of record embeddings

    key = jax.random.PRNGKey(0)
    k_param, k_x = jax.random.split(key)

    model = DecoderPallas(record_num, user_num, class_num, latent_dimension,
                          k_param)
    record_embed = jax.random.normal(
        k_x, (replay_num, record_num), dtype=jnp.float32)

    side_info, gen_answer = model(record_embed)
    jax.block_until_ready((side_info, gen_answer))

    # --- pure-JAX reference (same math as the PyTorch forward) ---
    h_ref = record_embed @ model.w_enc + model.b_enc
    side_ref = jax.nn.sigmoid(h_ref)
    logits_ref = side_ref @ model.w_dec + model.b_dec
    ans_ref = jax.nn.softmax(
        logits_ref.reshape(replay_num, user_num, class_num), axis=-1
    ).reshape(replay_num, user_num * class_num)

    assert side_info.shape == (replay_num, latent_dimension)
    assert gen_answer.shape == (replay_num, user_num * class_num)
    # tolerances account for pl.reciprocal(approx=True) on sigmoid / softmax
    assert jnp.allclose(side_info, side_ref, atol=1e-2, rtol=1e-2)
    assert jnp.allclose(gen_answer, ans_ref, atol=1e-2, rtol=1e-2)
    assert jnp.allclose(
        jnp.sum(gen_answer.reshape(replay_num, user_num, class_num), axis=-1),
        1.0, atol=1e-2)

    print("KERNEL_OK")
</pallas_src>

<mosaic_0001>
module attributes {stable_mosaic.version = 11 : i64} {
  func.func @_decoder_fwd_kernel(%arg0: i32, %arg1: memref<8x32xf32, #tpu.memory_space<vmem>>, %arg2: memref<32x8xf32, #tpu.memory_space<vmem>>, %arg3: memref<1x8xf32, #tpu.memory_space<vmem>>, %arg4: memref<8x16xf32, #tpu.memory_space<vmem>>, %arg5: memref<1x16xf32, #tpu.memory_space<vmem>>, %arg6: memref<8x8xf32, #tpu.memory_space<vmem>>, %arg7: memref<8x16xf32, #tpu.memory_space<vmem>>) attributes {dimension_semantics = [#tpu.dimension_semantics<parallel>], iteration_bounds = array<i64: 1>, scalar_prefetch = 0 : i64, scratch_operands = 0 : i64, tpu.core_type = #tpu.core_type<tc>, window_params = [{transform_indices = @transform_0, window_bounds = array<i64: 8, 32>}, {pipeline_mode = #tpu.pipeline_mode<synchronous>, transform_indices = @transform_1, window_bounds = array<i64: 32, 8>}, {pipeline_mode = #tpu.pipeline_mode<synchronous>, transform_indices = @transform_2, window_bounds = array<i64: 1, 8>}, {pipeline_mode = #tpu.pipeline_mode<synchronous>, transform_indices = @transform_3, window_bounds = array<i64: 8, 16>}, {pipeline_mode = #tpu.pipeline_mode<synchronous>, transform_indices = @transform_4, window_bounds = array<i64: 1, 16>}, {transform_indices = @transform_5, window_bounds = array<i64: 8, 8>}, {transform_indices = @transform_6, window_bounds = array<i64: 8, 16>}]} {
    %c0 = arith.constant 0 : index
    %c0_0 = arith.constant 0 : index
    %0 = vector.load %arg1[%c0, %c0_0] : memref<8x32xf32, #tpu.memory_space<vmem>>, vector<8x32xf32>
    %c0_1 = arith.constant 0 : index
    %c0_2 = arith.constant 0 : index
    %1 = vector.load %arg2[%c0_1, %c0_2] : memref<32x8xf32, #tpu.memory_space<vmem>>, vector<32x8xf32>
    %cst = arith.constant dense<0.000000e+00> : vector<8x8xf32>
    %2 = tpu.matmul %0, %1, %cst {dimension_numbers = #tpu.dot_dimension_numbers<[1], [0], [0], [1], [0, 0, 1, 1], [], []>} : vector<8x32xf32>, vector<32x8xf32>, vector<8x8xf32> -> vector<8x8xf32>
    %c0_3 = arith.constant 0 : index
    %c0_4 = arith.constant 0 : index
    %3 = vector.load %arg3[%c0_3, %c0_4] : memref<1x8xf32, #tpu.memory_space<vmem>>, vector<1x8xf32>
    %4 = vector.broadcast %3 : vector<1x8xf32> to vector<8x8xf32>
    %5 = arith.addf %2, %4 : vector<8x8xf32>
    %cst_5 = arith.constant 0.000000e+00 : f32
    %6 = vector.broadcast %cst_5 : f32 to vector<8x8xf32>
    %7 = arith.subf %6, %5 : vector<8x8xf32>
    %8 = math.exp %7 : vector<8x8xf32>
    %cst_6 = arith.constant 1.000000e+00 : f32
    %9 = vector.broadcast %cst_6 : f32 to vector<8x8xf32>
    %10 = arith.addf %9, %8 : vector<8x8xf32>
    %11 = tpu.reciprocal %10 {approx = true} : vector<8x8xf32> -> vector<8x8xf32>
    %c0_7 = arith.constant 0 : index
    %c0_8 = arith.constant 0 : index
    %12 = vector.load %arg6[%c0_7, %c0_8] : memref<8x8xf32, #tpu.memory_space<vmem>>, vector<8x8xf32>
    tpu.vector_store %arg6[%c0_7, %c0_8], %11 {strides = array<i32>} : memref<8x8xf32, #tpu.memory_space<vmem>>, vector<8x8xf32>,
    %c0_9 = arith.constant 0 : index
    %c0_10 = arith.constant 0 : index
    %13 = vector.load %arg4[%c0_9, %c0_10] : memref<8x16xf32, #tpu.memory_space<vmem>>, vector<8x16xf32>
    %cst_11 = arith.constant dense<0.000000e+00> : vector<8x16xf32>
    %14 = tpu.matmul %11, %13, %cst_11 {dimension_numbers = #tpu.dot_dimension_numbers<[1], [0], [0], [1], [0, 0, 1, 1], [], []>} : vector<8x8xf32>, vector<8x16xf32>, vector<8x16xf32> -> vector<8x16xf32>
    %c0_12 = arith.constant 0 : index
    %c0_13 = arith.constant 0 : index
    %15 = vector.load %arg5[%c0_12, %c0_13] : memref<1x16xf32, #tpu.memory_space<vmem>>, vector<1x16xf32>
    %16 = vector.broadcast %15 : vector<1x16xf32> to vector<8x16xf32>
    %17 = arith.addf %14, %16 : vector<8x16xf32>
    %18 = vector.extract_strided_slice %17 {offsets = [0, 0], sizes = [8, 4], strides = [1, 1]} : vector<8x16xf32> to vector<8x4xf32>
    %cst_14 = arith.constant dense<0xFF800000> : vector<8xf32>
    %19 = vector.multi_reduction <maximumf>, %18, %cst_14 [1] : vector<8x4xf32> to vector<8xf32>
    %20 = vector.shape_cast %19 : vector<8xf32> to vector<8x1xf32>
    %21 = vector.broadcast %20 : vector<8x1xf32> to vector<8x4xf32>
    %22 = arith.subf %18, %21 : vector<8x4xf32>
    %23 = math.exp %22 : vector<8x4xf32>
    %cst_15 = arith.constant dense<0.000000e+00> : vector<8xf32>
    %24 = vector.multi_reduction <add>, %23, %cst_15 [1] : vector<8x4xf32> to vector<8xf32>
    %25 = vector.shape_cast %24 : vector<8xf32> to vector<8x1xf32>
    %26 = tpu.reciprocal %25 {approx = true} : vector<8x1xf32> -> vector<8x1xf32>
    %27 = vector.broadcast %26 : vector<8x1xf32> to vector<8x4xf32>
    %28 = arith.mulf %23, %27 : vector<8x4xf32>
    %c0_16 = arith.constant 0 : index
    %c0_17 = arith.constant 0 : index
    %29 = vector.load %arg7[%c0_16, %c0_17] : memref<8x16xf32, #tpu.memory_space<vmem>>, vector<8x4xf32>
    tpu.vector_store %arg7[%c0_16, %c0_17], %28 {strides = array<i32>} : memref<8x16xf32, #tpu.memory_space<vmem>>, vector<8x4xf32>,
    %30 = vector.extract_strided_slice %17 {offsets = [0, 4], sizes = [8, 4], strides = [1, 1]} : vector<8x16xf32> to vector<8x4xf32>
    %cst_18 = arith.constant dense<0xFF800000> : vector<8xf32>
    %31 = vector.multi_reduction <maximumf>, %30, %cst_18 [1] : vector<8x4xf32> to vector<8xf32>
    %32 = vector.shape_cast %31 : vector<8xf32> to vector<8x1xf32>
    %33 = vector.broadcast %32 : vector<8x1xf32> to vector<8x4xf32>
    %34 = arith.subf %30, %33 : vector<8x4xf32>
    %35 = math.exp %34 : vector<8x4xf32>
    %cst_19 = arith.constant dense<0.000000e+00> : vector<8xf32>
    %36 = vector.multi_reduction <add>, %35, %cst_19 [1] : vector<8x4xf32> to vector<8xf32>
    %37 = vector.shape_cast %36 : vector<8xf32> to vector<8x1xf32>
    %38 = tpu.reciprocal %37 {approx = true} : vector<8x1xf32> -> vector<8x1xf32>
    %39 = vector.broadcast %38 : vector<8x1xf32> to vector<8x4xf32>
    %40 = arith.mulf %35, %39 : vector<8x4xf32>
    %c0_20 = arith.constant 0 : index
    %c4 = arith.constant 4 : index
    %41 = vector.load %arg7[%c0_20, %c4] : memref<8x16xf32, #tpu.memory_space<vmem>>, vector<8x4xf32>
    tpu.vector_store %arg7[%c0_20, %c4], %40 {strides = array<i32>} : memref<8x16xf32, #tpu.memory_space<vmem>>, vector<8x4xf32>,
    %42 = vector.extract_strided_slice %17 {offsets = [0, 8], sizes = [8, 4], strides = [1, 1]} : vector<8x16xf32> to vector<8x4xf32>
    %cst_21 = arith.constant dense<0xFF800000> : vector<8xf32>
    %43 = vector.multi_reduction <maximumf>, %42, %cst_21 [1] : vector<8x4xf32> to vector<8xf32>
    %44 = vector.shape_cast %43 : vector<8xf32> to vector<8x1xf32>
    %45 = vector.broadcast %44 : vector<8x1xf32> to vector<8x4xf32>
    %46 = arith.subf %42, %45 : vector<8x4xf32>
    %47 = math.exp %46 : vector<8x4xf32>
    %cst_22 = arith.constant dense<0.000000e+00> : vector<8xf32>
    %48 = vector.multi_reduction <add>, %47, %cst_22 [1] : vector<8x4xf32> to vector<8xf32>
    %49 = vector.shape_cast %48 : vector<8xf32> to vector<8x1xf32>
    %50 = tpu.reciprocal %49 {approx = true} : vector<8x1xf32> -> vector<8x1xf32>
    %51 = vector.broadcast %50 : vector<8x1xf32> to vector<8x4xf32>
    %52 = arith.mulf %47, %51 : vector<8x4xf32>
    %c0_23 = arith.constant 0 : index
    %c8 = arith.constant 8 : index
    %53 = vector.load %arg7[%c0_23, %c8] : memref<8x16xf32, #tpu.memory_space<vmem>>, vector<8x4xf32>
    tpu.vector_store %arg7[%c0_23, %c8], %52 {strides = array<i32>} : memref<8x16xf32, #tpu.memory_space<vmem>>, vector<8x4xf32>,
    %54 = vector.extract_strided_slice %17 {offsets = [0, 12], sizes = [8, 4], strides = [1, 1]} : vector<8x16xf32> to vector<8x4xf32>
    %cst_24 = arith.constant dense<0xFF800000> : vector<8xf32>
    %55 = vector.multi_reduction <maximumf>, %54, %cst_24 [1] : vector<8x4xf32> to vector<8xf32>
    %56 = vector.shape_cast %55 : vector<8xf32> to vector<8x1xf32>
    %57 = vector.broadcast %56 : vector<8x1xf32> to vector<8x4xf32>
    %58 = arith.subf %54, %57 : vector<8x4xf32>
    %59 = math.exp %58 : vector<8x4xf32>
    %cst_25 = arith.constant dense<0.000000e+00> : vector<8xf32>
    %60 = vector.multi_reduction <add>, %59, %cst_25 [1] : vector<8x4xf32> to vector<8xf32>
    %61 = vector.shape_cast %60 : vector<8xf32> to vector<8x1xf32>
    %62 = tpu.reciprocal %61 {approx = true} : vector<8x1xf32> -> vector<8x1xf32>
    %63 = vector.broadcast %62 : vector<8x1xf32> to vector<8x4xf32>
    %64 = arith.mulf %59, %63 : vector<8x4xf32>
    %c0_26 = arith.constant 0 : index
    %c12 = arith.constant 12 : index
    %65 = vector.load %arg7[%c0_26, %c12] : memref<8x16xf32, #tpu.memory_space<vmem>>, vector<8x4xf32>
    tpu.vector_store %arg7[%c0_26, %c12], %64 {strides = array<i32>} : memref<8x16xf32, #tpu.memory_space<vmem>>, vector<8x4xf32>,
    return
  }
  func.func @transform_0(%arg0: i32) -> (i32, i32) {
    %c0_i32 = arith.constant 0 : i32
    %c0_i32_0 = arith.constant 0 : i32
    return %arg0, %c0_i32 : i32, i32
  }
  func.func @transform_1(%arg0: i32) -> (i32, i32) {
    %c0_i32 = arith.constant 0 : i32
    %c0_i32_0 = arith.constant 0 : i32
    %c0_i32_1 = arith.constant 0 : i32
    return %c0_i32, %c0_i32_0 : i32, i32
  }
  func.func @transform_2(%arg0: i32) -> (i32, i32) {
    %c0_i32 = arith.constant 0 : i32
    %c0_i32_0 = arith.constant 0 : i32
    %c0_i32_1 = arith.constant 0 : i32
    return %c0_i32, %c0_i32_0 : i32, i32
  }
  func.func @transform_3(%arg0: i32) -> (i32, i32) {
    %c0_i32 = arith.constant 0 : i32
    %c0_i32_0 = arith.constant 0 : i32
    %c0_i32_1 = arith.constant 0 : i32
    return %c0_i32, %c0_i32_0 : i32, i32
  }
  func.func @transform_4(%arg0: i32) -> (i32, i32) {
    %c0_i32 = arith.constant 0 : i32
    %c0_i32_0 = arith.constant 0 : i32
    %c0_i32_1 = arith.constant 0 : i32
    return %c0_i32, %c0_i32_0 : i32, i32
  }
  func.func @transform_5(%arg0: i32) -> (i32, i32) {
    %c0_i32 = arith.constant 0 : i32
    %c0_i32_0 = arith.constant 0 : i32
    return %arg0, %c0_i32 : i32, i32
  }
  func.func @transform_6(%arg0: i32) -> (i32, i32) {
    %c0_i32 = arith.constant 0 : i32
    %c0_i32_0 = arith.constant 0 : i32
    return %arg0, %c0_i32 : i32, i32
  }
}

</mosaic_0001>

<llo_original>
// kernel: tpu_custom_call.1
$region0: #{tpu_custom_call.1}
  #allocation0 [shape = 'u32[]', space=smem, size = 0x4, offset = 0x4, fixed_abs, tag = 'smem constant byte address 0x4 - core index']
  #allocation1 [shape = 'u32[144,128]{1,0:T(1,128)}', space=vmem, size = 0x12000, scoped, tag = 'internal scratch']
  %s0 = inlined_call_operand.vmem [shape: f32[8,32], index: 0, kind: input, shape index: {}]
  %s1 = inlined_call_operand.vmem [shape: f32[32,8], index: 1, kind: input, shape index: {}]
  %s2 = inlined_call_operand.vmem [shape: f32[1,8], index: 2, kind: input, shape index: {}]
  %s3 = inlined_call_operand.vmem [shape: f32[8,16], index: 3, kind: input, shape index: {}]
  %s4 = inlined_call_operand.vmem [shape: f32[1,16], index: 4, kind: input, shape index: {}]
  %s5 = inlined_call_operand.hbm [shape: f32[8,8], index: 5, kind: output, shape index: {0}]
  %s6 = inlined_call_operand.hbm [shape: f32[8,16], index: 6, kind: output, shape index: {1}]
  %7 = xla_tuple %s5, %s6
  %s8 = sld [smem:[#allocation0]]
  $region38: #{tpu_custom_call.1} parent=0
    _
  %s10 = ssub.s32 1, %s8
  %s11 = scalar_select 0, %s10, %s8
  $region1: #{tpu_custom_call.1} parent=0
    #allocation2 [shape = 'u8[4096]{0}', space=vmem, size = 0x1000, scoped, tag = 'output window, operand 0, single buffered']
    #allocation3 [shape = 's32[1]{0}', space=sflag, size = 0x4, scoped, tag = 'scoped memory for tpu_custom_call.1']
    #allocation4 [shape = 'u8[4096]{0}', space=vmem, size = 0x1000, scoped, tag = 'output window, operand 1, single buffered']
    #allocation5 [shape = 's32[1]{0}', space=sflag, size = 0x4, scoped, tag = 'scoped memory for tpu_custom_call.1']
    %12 = vsyncpa [#allocation3], 0
    %13 = vsyncpa [#allocation5], 0
    // Predicated region
    $region2: #{tpu_custom_call.1} parent=1 // pred_check
      _
    $region3: #{tpu_custom_call.1} parent=1 // pred_check_branch
      %15 = sbr.rel (0) target = $region5
    $region4: #{tpu_custom_call.1} parent=1 // pred_region
      _
    $region5: #{tpu_custom_call.1} parent=1 // pred_fallthru
      _
    // Predicated region
    $region6: #{tpu_custom_call.1} parent=1 // pred_check
      _
    $region7: #{tpu_custom_call.1} parent=1 // pred_check_branch
      %17 = sbr.rel (0) target = $region9
    $region8: #{tpu_custom_call.1} parent=1 // pred_region
      _
    $region9: #{tpu_custom_call.1} parent=1 // pred_fallthru
      _
    // Predicated region
    $region10: #{tpu_custom_call.1} parent=1 // pred_check
      _
    $region11: #{tpu_custom_call.1} parent=1 // pred_check_branch
      %19 = sbr.rel (0) target = $region13
    $region12: #{tpu_custom_call.1} parent=1 // pred_region
      _
    $region13: #{tpu_custom_call.1} parent=1 // pred_fallthru
      _
    // Predicated region
    $region14: #{tpu_custom_call.1} parent=1 // pred_check
      _
    $region15: #{tpu_custom_call.1} parent=1 // pred_check_branch
      %21 = sbr.rel (0) target = $region17
    $region16: #{tpu_custom_call.1} parent=1 // pred_region
      _
    $region17: #{tpu_custom_call.1} parent=1 // pred_fallthru
      _
    // Predicated region
    $region18: #{tpu_custom_call.1} parent=1 // pred_check
      _
    $region19: #{tpu_custom_call.1} parent=1 // pred_check_branch
      %23 = sbr.rel (0) target = $region21
    $region20: #{tpu_custom_call.1} parent=1 // pred_region
      _
    $region21: #{tpu_custom_call.1} parent=1 // pred_fallthru
      _
    %v24 = vld [vmem:[%s0] sm:$0xff]
    %v25 = vld [vmem:[%s1] sm:$0xff]
    %v26 = vld [vmem:[%s1 + $0x8] sm:$0xff]
    %v27 = vld [vmem:[%s1 + $0x10] sm:$0xff]
    %v28 = vld [vmem:[%s1 + $0x18] sm:$0xff]
    %v29 = vld [vmem:[%s2] sm:$0x1]
    %v31 = vlaneseq
    %v32 = vshrl.u32 %v31, 7
    %v33 = vsub.s32 0, %v32
    %v34 = vrot.slane %v29, %v33
    %vm36 = vcmask 261120
    %v38 = vsel %vm36, %v24, 0
    %40 = vmatprep.subr.mxu0 0.0
    %41 = vmatpush1.msra.mxu0 0.0
    %42 = vmatprep.subr.mxu0 0.0
    %43 = vmatpush1.msra.mxu0 0.0
    %44 = vmatprep.subr.mxu0 0.0
    %45 = vmatpush1.msra.mxu0 0.0
    %46 = vmatprep.subr.mxu0 0.0
    %47 = vmatpush1.msra.mxu0 0.0
    %48 = vmatprep.subr.mxu0 0.0
    %49 = vmatpush1.msra.mxu0 0.0
    %50 = vmatprep.subr.mxu0 0.0
    %51 = vmatpush1.msra.mxu0 0.0
    %52 = vmatprep.subr.mxu0 0.0
    %53 = vmatpush1.msra.mxu0 0.0
    %54 = vmatprep.subr.mxu0 0.0
    %55 = vmatpush1.msra.mxu0 0.0
    %56 = vmatprep.subr.mxu0 0.0
    %57 = vmatpush1.msra.mxu0 0.0
    %58 = vmatprep.subr.mxu0 0.0
    %59 = vmatpush1.msra.mxu0 0.0
    %60 = vmatprep.subr.mxu0 0.0
    %61 = vmatpush1.msra.mxu0 0.0
    %62 = vmatprep.subr.mxu0 0.0
    %63 = vmatpush1.msra.mxu0 0.0
    %64 = vmatprep.subr.mxu0 0.0
    %65 = vmatpush1.msra.mxu0 %v28
    %66 = vmatprep.subr.mxu0 0.0
    %67 = vmatpush1.msra.mxu0 %v27
    %68 = vmatprep.subr.mxu0 0.0
    %69 = vmatpush1.msra.mxu0 %v26
    %70 = vmatprep.subr.mxu0 0.0
    %71 = vmatpush1.msra.mxu0 %v25
    %72 = vmatprep.subr.mxu0 0.0
    %73 = vmatpush2.msra.mxu0 0.0
    %74 = vmatprep.subr.mxu0 0.0
    %75 = vmatpush2.msra.mxu0 0.0
    %76 = vmatprep.subr.mxu0 0.0
    %77 = vmatpush2.msra.mxu0 0.0
    %78 = vmatprep.subr.mxu0 0.0
    %79 = vmatpush2.msra.mxu0 0.0
    %80 = vmatprep.subr.mxu0 0.0
    %81 = vmatpush2.msra.mxu0 0.0
    %82 = vmatprep.subr.mxu0 0.0
    %83 = vmatpush2.msra.mxu0 0.0
    %84 = vmatprep.subr.mxu0 0.0
    %85 = vmatpush2.msra.mxu0 0.0
    %86 = vmatprep.subr.mxu0 0.0
    %87 = vmatpush2.msra.mxu0 0.0
    %88 = vmatprep.subr.mxu0 0.0
    %89 = vmatpush2.msra.mxu0 0.0
    %90 = vmatprep.subr.mxu0 0.0
    %91 = vmatpush2.msra.mxu0 0.0
    %92 = vmatprep.subr.mxu0 0.0
    %93 = vmatpush2.msra.mxu0 0.0
    %94 = vmatprep.subr.mxu0 0.0
    %95 = vmatpush2.msra.mxu0 0.0
    %96 = vmatprep.subr.mxu0 0.0
    %97 = vmatpush2.msra.mxu0 0.0
    %98 = vmatprep.subr.mxu0 0.0
    %99 = vmatpush2.msra.mxu0 0.0
    %100 = vmatprep.subr.mxu0 0.0
    %101 = vmatpush2.msra.mxu0 0.0
    %102 = vmatprep.subr.mxu0 0.0
    %103 = vmatpush2.msra.mxu0 0.0
    %104 = vmatprep.mubr.f32.mxu0 0.0
    %105 = vmatmul.mubr.f32.gmra.mxu0 %v38
    %v106 = vpop.f32.mrf.mxu0
    %v107 = vadd.f32 %v34, %v106
    %v108 = vpop.f32.mrf.mxu0
    %109 = vdwg.mxu0
    %v110 = vsub.f32 0.0, %v107
    %v111 = vmul.f32 %v110, 1.442695
    %v112 = vpow.pop %v111
    %v113 = vadd.f32 %v112, 1.0
    %v114 = vrcp.pop %v113
    %vm115 = vcmask 64512
    %116 = vst.msk [vmem:[#allocation2] sm:$0xff] %vm115, %v114
    %v117 = vld [vmem:[%s3] sm:$0xff]
    %v118 = vld [vmem:[%s4] sm:$0x1]
    %v120 = vlaneseq
    %v121 = vshrl.u32 %v120, 7
    %v122 = vsub.s32 0, %v121
    %v123 = vrot.slane %v118, %v122
    %v126 = vsel %vm115, %v114, 0
    %128 = vmatprep.subr.mxu0 0.0
    %129 = vmatpush1.msra.mxu0 0.0
    %130 = vmatprep.subr.mxu0 0.0
    %131 = vmatpush1.msra.mxu0 0.0
    %132 = vmatprep.subr.mxu0 0.0
    %133 = vmatpush1.msra.mxu0 0.0
    %134 = vmatprep.subr.mxu0 0.0
    %135 = vmatpush1.msra.mxu0 0.0
    %136 = vmatprep.subr.mxu0 0.0
    %137 = vmatpush1.msra.mxu0 0.0
    %138 = vmatprep.subr.mxu0 0.0
    %139 = vmatpush1.msra.mxu0 0.0
    %140 = vmatprep.subr.mxu0 0.0
    %141 = vmatpush1.msra.mxu0 0.0
    %142 = vmatprep.subr.mxu0 0.0
    %143 = vmatpush1.msra.mxu0 0.0
    %144 = vmatprep.subr.mxu0 0.0
    %145 = vmatpush1.msra.mxu0 0.0
    %146 = vmatprep.subr.mxu0 0.0
    %147 = vmatpush1.msra.mxu0 0.0
    %148 = vmatprep.subr.mxu0 0.0
    %149 = vmatpush1.msra.mxu0 0.0
    %150 = vmatprep.subr.mxu0 0.0
    %151 = vmatpush1.msra.mxu0 0.0
    %152 = vmatprep.subr.mxu0 0.0
    %153 = vmatpush1.msra.mxu0 0.0
    %154 = vmatprep.subr.mxu0 0.0
    %155 = vmatpush1.msra.mxu0 0.0
    %156 = vmatprep.subr.mxu0 0.0
    %157 = vmatpush1.msra.mxu0 0.0
    %158 = vmatprep.subr.mxu0 0.0
    %159 = vmatpush1.msra.mxu0 %v117
    %160 = vmatprep.subr.mxu0 0.0
    %161 = vmatpush2.msra.mxu0 0.0
    %162 = vmatprep.subr.mxu0 0.0
    %163 = vmatpush2.msra.mxu0 0.0
    %164 = vmatprep.subr.mxu0 0.0
    %165 = vmatpush2.msra.mxu0 0.0
    %166 = vmatprep.subr.mxu0 0.0
    %167 = vmatpush2.msra.mxu0 0.0
    %168 = vmatprep.subr.mxu0 0.0
    %169 = vmatpush2.msra.mxu0 0.0
    %170 = vmatprep.subr.mxu0 0.0
    %171 = vmatpush2.msra.mxu0 0.0
    %172 = vmatprep.subr.mxu0 0.0
    %173 = vmatpush2.msra.mxu0 0.0
    %174 = vmatprep.subr.mxu0 0.0
    %175 = vmatpush2.msra.mxu0 0.0
    %176 = vmatprep.subr.mxu0 0.0
    %177 = vmatpush2.msra.mxu0 0.0
    %178 = vmatprep.subr.mxu0 0.0
    %179 = vmatpush2.msra.mxu0 0.0
    %180 = vmatprep.subr.mxu0 0.0
    %181 = vmatpush2.msra.mxu0 0.0
    %182 = vmatprep.subr.mxu0 0.0
    %183 = vmatpush2.msra.mxu0 0.0
    %184 = vmatprep.subr.mxu0 0.0
    %185 = vmatpush2.msra.mxu0 0.0
    %186 = vmatprep.subr.mxu0 0.0
    %187 = vmatpush2.msra.mxu0 0.0
    %188 = vmatprep.subr.mxu0 0.0
    %189 = vmatpush2.msra.mxu0 0.0
    %190 = vmatprep.subr.mxu0 0.0
    %191 = vmatpush2.msra.mxu0 0.0
    %192 = vmatprep.mubr.f32.mxu0 0.0
    %193 = vmatmul.mubr.f32.gmra.mxu0 %v126
    %v194 = vpop.f32.mrf.mxu0
    %v195 = vadd.f32 %v123, %v194
    %v196 = vpop.f32.mrf.mxu0
    %197 = vdwg.mxu0
    %vm198 = vcmask 31744
    %v199 = vsel %vm198, %v195, -inf
    %200 = vmax.xlane.f32.xlu0 %v199
    %v201 = vpop.xlane.xlu0 %200
    %v202 = vsub.f32 %v195, %v201
    %v203 = vmul.f32 %v202, 1.442695
    %v204 = vpow.pop %v203
    %v205 = vsel %vm198, %v204, 0.0
    %206 = vadd.xlane.f32.xlu0 %v205
    %v207 = vpop.xlane.xlu0 %206
    %v208 = vrcp.pop %v207
    %v209 = vmul.f32 %v204, %v208
    %210 = vst.msk [vmem:[#allocation4] sm:$0xff] %vm198, %v209
    %vm211 = vcmask 64544
    %v212 = vsel %vm211, %v195, -inf
    %213 = vmax.xlane.f32.xlu0 %v212
    %v214 = vpop.xlane.xlu0 %213
    %v215 = vsub.f32 %v195, %v214
    %v216 = vmul.f32 %v215, 1.442695
    %v217 = vpow.pop %v216
    %219 = vrot.lane.b32.xlu0 %v217, 124
    %v220 = vpop.permute.xlu0 %219
    %v222 = vsel %vm198, %v220, 0.0
    %223 = vadd.xlane.f32.xlu0 %v222
    %v224 = vpop.xlane.xlu0 %223
    %v225 = vrcp.pop %v224
    %v226 = vmul.f32 %v217, %v225
    %227 = vst.msk [vmem:[#allocation4] sm:$0xff] %vm211, %v226
    %vm228 = vcmask 97344
    %v229 = vsel %vm228, %v195, -inf
    %230 = vmax.xlane.f32.xlu0 %v229
    %v231 = vpop.xlane.xlu0 %230
    %v232 = vsub.f32 %v195, %v231
    %v233 = vmul.f32 %v232, 1.442695
    %v234 = vpow.pop %v233
    %236 = vrot.lane.b32.xlu0 %v234, 120
    %v237 = vpop.permute.xlu0 %236
    %v239 = vsel %vm198, %v237, 0.0
    %240 = vadd.xlane.f32.xlu0 %v239
    %v241 = vpop.xlane.xlu0 %240
    %v242 = vrcp.pop %v241
    %v243 = vmul.f32 %v234, %v242
    %244 = vst.msk [vmem:[#allocation4] sm:$0xff] %vm228, %v243
    %vm245 = vcmask 130144
    %v246 = vsel %vm245, %v195, -inf
    %247 = vmax.xlane.f32.xlu0 %v246
    %v248 = vpop.xlane.xlu0 %247
    %v249 = vsub.f32 %v195, %v248
    %v250 = vmul.f32 %v249, 1.442695
    %v251 = vpow.pop %v250
    %253 = vrot.lane.b32.xlu0 %v251, 116
    %v254 = vpop.permute.xlu0 %253
    %v256 = vsel %vm198, %v254, 0.0
    %257 = vadd.xlane.f32.xlu0 %v256
    %v258 = vpop.xlane.xlu0 %257
    %v259 = vrcp.pop %v258
    %v260 = vmul.f32 %v251, %v259
    %261 = vst.msk [vmem:[#allocation4] sm:$0xff] %vm245, %v260
    // Predicated region
    $region22: #{tpu_custom_call.1} parent=1 // pred_check
      _
    $region23: #{tpu_custom_call.1} parent=1 // pred_check_branch
      %263 = sbr.rel (0) target = $region25
    $region24: #{tpu_custom_call.1} parent=1 // pred_region
      %s265 = ssub.s32 128, 128
      %266 = vsyncadd [#allocation3], %s265
      %s268 = sshll.u32 [#allocation2], 4
      %s269 = int_to_ptr.vmem [resolvable:$true] %s268
      %271 = dma.vmem_to_hbm [thread:$0]  %s269, 128, %s5, [#allocation3]
    $region25: #{tpu_custom_call.1} parent=1 // pred_fallthru
      _
    // Predicated region
    $region26: #{tpu_custom_call.1} parent=1 // pred_check
      _
    $region27: #{tpu_custom_call.1} parent=1 // pred_check_branch
      %273 = sbr.rel (0) target = $region29
    $region28: #{tpu_custom_call.1} parent=1 // pred_region
      %s275 = ssub.s32 128, 128
      %276 = vsyncadd [#allocation5], %s275
      %s278 = sshll.u32 [#allocation4], 4
      %s279 = int_to_ptr.vmem [resolvable:$true] %s278
      %281 = dma.vmem_to_hbm [thread:$0]  %s279, 128, %s6, [#allocation5]
    $region29: #{tpu_custom_call.1} parent=1 // pred_fallthru
      _
    // Predicated region
    $region30: #{tpu_custom_call.1} parent=1 // pred_check
      _
    $region31: #{tpu_custom_call.1} parent=1 // pred_check_branch
      %283 = sbr.rel (0) target = $region33
    $region32: #{tpu_custom_call.1} parent=1 // pred_region
      %284 = dma.done [#allocation3], 128
    $region33: #{tpu_custom_call.1} parent=1 // pred_fallthru
      _
    // Predicated region
    $region34: #{tpu_custom_call.1} parent=1 // pred_check
      _
    $region35: #{tpu_custom_call.1} parent=1 // pred_check_branch
      %286 = sbr.rel (0) target = $region37
    $region36: #{tpu_custom_call.1} parent=1 // pred_region
      %287 = dma.done [#allocation5], 128
    $region37: #{tpu_custom_call.1} parent=1 // pred_fallthru
      _
    %288 = vsyncpa [#allocation3], 1
    %289 = vsyncpa [#allocation5], 1

</llo_original>
